<compile_context>
chip_gen: v7x
topology: tpu7x:2x2x1
jax: 0.10.0
libtpu: 0.0.40
codegen_flags: <defaults>
</compile_context>

<pallas_src>
import jax
import jax.numpy as jnp
from jax.experimental import pallas as pl
from jax.experimental.pallas import tpu as pltpu


def _round_up(x, m):
    return ((x + m - 1) // m) * m


def _attentive_pool_kernel(mem_ref, wt_ref, b_ref, u_ref, mask_ref, out_ref):
    # mem_ref : (Bb, T, H)  bf16  block of batch elements
    # wt_ref  : (H, H)      bf16  W_w^T  (y = x @ wt + b)
    # b_ref   : (1, H)      f32
    # u_ref   : (1, H)      f32   W_u as a row vector
    # mask_ref: (Bb, T, 1)  f32   1.0 = keep, 0.0 = masked out
    # out_ref : (Bb, H)     f32
    Bb, T, H = mem_ref.shape

    # Load once. Keep reshapes on f32 values (native (8,128) tiling) and cast
    # to bf16 only for the MXU operand; the values are identical to the bf16
    # data in HBM, so the detour costs a couple of cheap VPU casts.
    mem_f32 = mem_ref[...].astype(jnp.float32)                    # (Bb, T, H)
    lhs = mem_f32.reshape(Bb * T, H).astype(jnp.bfloat16)         # (Bb*T, H)

    # h = tanh(memory @ W_w^T + b_w): one large-M bf16 MXU matmul, f32 accum.
    h = jnp.tanh(
        jnp.dot(lhs, wt_ref[...], preferred_element_type=jnp.float32)
        + b_ref[...]
    )                                                             # (Bb*T, H) f32

    # score = h @ W_u^T: N=1 MXU matmul replaced by VPU mul + lane reduce.
    score = jnp.sum(h * u_ref[...], axis=1, keepdims=True)        # (Bb*T, 1)
    score = score.reshape(Bb, T, 1)                               # T on sublanes

    # masked_fill(mask == 0, -1e9)
    score = jnp.where(mask_ref[...] == 0.0, jnp.float32(-1e9), score)

    # softmax over T (sublane axis); all f32.
    m = jnp.max(score, axis=1, keepdims=True)                     # (Bb, 1, 1)
    e = jnp.exp(score - m)                                        # (Bb, T, 1)
    denom = jnp.sum(e, axis=1, keepdims=True)                     # (Bb, 1, 1)
    alpha = e * pl.reciprocal(denom, approx=True)                 # (Bb, T, 1)

    # s = sum_t alpha_t * memory_t: broadcast mul (VPU) + sublane reduce.
    out_ref[...] = jnp.sum(alpha * mem_f32, axis=1).astype(out_ref.dtype)


def _pick_block_b(B, T_pad, H_pad, max_block_b=64,
                  vmem_budget=16 * 1024 * 1024):
    # Per batch element: double-buffered bf16 input tile plus ~3 f32-sized
    # in-kernel intermediates of the same (T, H) extent. Conservative budget so
    # the same Bb also fits v7x without raising vmem_limit_bytes.
    per_b = T_pad * H_pad * (2 * 2 + 3 * 4)
    bb = min(max_block_b, max(1, vmem_budget // max(per_b, 1)))
    bb = max(8, (bb // 8) * 8)           # multiple of 8 -> dense sublane stores
    bb = min(bb, _round_up(B, 8))        # don't pad tiny batches absurdly
    return bb


def attentive_pooling(memory, w_weight, w_bias, u_weight, mask=None):
    """memory: (B, T, H); w_weight: (H, H); w_bias: (H,); u_weight: (1, H);
    mask: optional (B, T) (nonzero = valid). Returns (B, H) in memory.dtype."""
    B, T, H = memory.shape
    out_dtype = memory.dtype
    if mask is None:
        mask = jnp.ones((B, T), dtype=jnp.float32)

    # Pad to TPU-friendly extents: H -> lanes (128), T -> sublanes (8),
    # B -> multiple of the per-step batch block. Zero padding plus a zero mask
    # on padded rows keeps the math identical on the real rows/columns.
    Hp = _round_up(H, 128)
    Tp = _round_up(T, 8)
    Bb = _pick_block_b(B, Tp, Hp)
    Bp = _round_up(B, Bb)

    mem_p = (jnp.zeros((Bp, Tp, Hp), jnp.bfloat16)
             .at[:B, :T, :H].set(memory.astype(jnp.bfloat16)))
    mask_p = (jnp.zeros((Bp, Tp, 1), jnp.float32)
              .at[:B, :T, 0].set(mask.astype(jnp.float32)))
    wt_p = (jnp.zeros((Hp, Hp), jnp.bfloat16)
            .at[:H, :H].set(jnp.asarray(w_weight, jnp.float32).T
                            .astype(jnp.bfloat16)))
    b_p = jnp.zeros((1, Hp), jnp.float32).at[0, :H].set(
        jnp.asarray(w_bias, jnp.float32))
    u_p = jnp.zeros((1, Hp), jnp.float32).at[0, :H].set(
        jnp.asarray(u_weight, jnp.float32).reshape(-1))

    # TODO(synk): single-buffer the constant weight/bias/u blocks
    # (pipeline_mode=pl.Buffered(1)) once verified on the target jax version;
    # at these shapes the double-buffered weight costs only ~2*Hp*Hp*2 bytes.
    out = pl.pallas_call(
        _attentive_pool_kernel,
        out_shape=jax.ShapeDtypeStruct((Bp, Hp), jnp.float32),
        grid_spec=pltpu.PrefetchScalarGridSpec(
            num_scalar_prefetch=0,
            grid=(Bp // Bb,),
            in_specs=[
                pl.BlockSpec((Bb, Tp, Hp), lambda i: (i, 0, 0)),  # memory
                pl.BlockSpec((Hp, Hp), lambda i: (0, 0)),         # W_w^T (bf16)
                pl.BlockSpec((1, Hp), lambda i: (0, 0)),          # b_w
                pl.BlockSpec((1, Hp), lambda i: (0, 0)),          # W_u
                pl.BlockSpec((Bb, Tp, 1), lambda i: (i, 0, 0)),   # mask
            ],
            out_specs=pl.BlockSpec((Bb, Hp), lambda i: (i, 0)),   # lane-dense
        ),
        compiler_params=pltpu.CompilerParams(
            dimension_semantics=("parallel",),
        ),
    )(mem_p, wt_p, b_p, u_p, mask_p)

    return out[:B, :H].astype(out_dtype)


def _reference(memory, w_weight, w_bias, u_weight, mask):
    h = jnp.tanh(jnp.einsum("bth,oh->bto", memory, w_weight) + w_bias)
    score = jnp.einsum("bth,oh->bto", h, u_weight)[..., 0]        # (B, T)
    score = jnp.where(mask == 0.0, -1e9, score)
    alpha = jax.nn.softmax(score, axis=-1)
    return jnp.sum(alpha[..., None] * memory, axis=1)


if __name__ == "__main__":
    B, T, H = 2, 8, 32
    key = jax.random.PRNGKey(0)
    k_mem, k_w, k_b, k_u, k_mask = jax.random.split(key, 5)

    memory = jax.random.normal(k_mem, (B, T, H), dtype=jnp.float32)
    # Deterministic synthetic parameters (shapes per nn.Linear in __init__).
    w_weight = jax.random.normal(k_w, (H, H), dtype=jnp.float32) * 0.1  # Linear(H, H).weight
    w_bias = jax.random.normal(k_b, (H,), dtype=jnp.float32) * 0.1      # Linear(H, H).bias
    u_weight = jax.random.normal(k_u, (1, H), dtype=jnp.float32) * 0.1  # Linear(H, 1).weight
    # Mask: last two timesteps of batch element 1 are padding.
    mask = jnp.ones((B, T), dtype=jnp.float32).at[1, T - 2:].set(0.0)

    out = attentive_pooling(memory, w_weight, w_bias, u_weight, mask)
    out = jax.block_until_ready(out)

    ref = _reference(memory, w_weight, w_bias, u_weight, mask)
    assert out.shape == (B, H)
    # bf16 MXU operands + approximate reciprocal: compare at bf16-level
    # tolerance against the pure-f32 reference (semantics are unchanged).
    assert jnp.allclose(out, ref, atol=3e-2, rtol=3e-2), "mismatch vs reference"

    print("KERNEL_OK")
</pallas_src>

<mosaic_0001>
module attributes {stable_mosaic.version = 11 : i64} {
  func.func @_attentive_pool_kernel(%arg0: i32, %arg1: memref<8x8x128xbf16, #tpu.memory_space<vmem>>, %arg2: memref<128x128xbf16, #tpu.memory_space<vmem>>, %arg3: memref<1x128xf32, #tpu.memory_space<vmem>>, %arg4: memref<1x128xf32, #tpu.memory_space<vmem>>, %arg5: memref<8x8x1xf32, #tpu.memory_space<vmem>>, %arg6: memref<8x128xf32, #tpu.memory_space<vmem>>) attributes {dimension_semantics = [#tpu.dimension_semantics<parallel>], iteration_bounds = array<i64: 1>, scalar_prefetch = 0 : i64, scratch_operands = 0 : i64, tpu.core_type = #tpu.core_type<tc>, window_params = [{transform_indices = @transform_0, window_bounds = array<i64: 8, 8, 128>}, {pipeline_mode = #tpu.pipeline_mode<synchronous>, transform_indices = @transform_1, window_bounds = array<i64: 128, 128>}, {pipeline_mode = #tpu.pipeline_mode<synchronous>, transform_indices = @transform_2, window_bounds = array<i64: 1, 128>}, {pipeline_mode = #tpu.pipeline_mode<synchronous>, transform_indices = @transform_3, window_bounds = array<i64: 1, 128>}, {transform_indices = @transform_4, window_bounds = array<i64: 8, 8, 1>}, {transform_indices = @transform_5, window_bounds = array<i64: 8, 128>}]} {
    %c0 = arith.constant 0 : index
    %c0_0 = arith.constant 0 : index
    %c0_1 = arith.constant 0 : index
    %0 = vector.load %arg1[%c0, %c0_0, %c0_1] : memref<8x8x128xbf16, #tpu.memory_space<vmem>>, vector<8x8x128xbf16>
    %1 = arith.extf %0 : vector<8x8x128xbf16> to vector<8x8x128xf32>
    %2 = vector.shape_cast %1 : vector<8x8x128xf32> to vector<64x128xf32>
    %3 = arith.truncf %2 : vector<64x128xf32> to vector<64x128xbf16>
    %c0_2 = arith.constant 0 : index
    %c0_3 = arith.constant 0 : index
    %4 = vector.load %arg2[%c0_2, %c0_3] : memref<128x128xbf16, #tpu.memory_space<vmem>>, vector<128x128xbf16>
    %cst = arith.constant dense<0.000000e+00> : vector<64x128xf32>
    %5 = tpu.matmul %3, %4, %cst {dimension_numbers = #tpu.dot_dimension_numbers<[1], [0], [0], [1], [0, 0, 1, 1], [], []>} : vector<64x128xbf16>, vector<128x128xbf16>, vector<64x128xf32> -> vector<64x128xf32>
    %c0_4 = arith.constant 0 : index
    %c0_5 = arith.constant 0 : index
    %6 = vector.load %arg3[%c0_4, %c0_5] : memref<1x128xf32, #tpu.memory_space<vmem>>, vector<1x128xf32>
    %7 = vector.broadcast %6 : vector<1x128xf32> to vector<64x128xf32>
    %8 = arith.addf %5, %7 : vector<64x128xf32>
    %9 = math.tanh %8 : vector<64x128xf32>
    %c0_6 = arith.constant 0 : index
    %c0_7 = arith.constant 0 : index
    %10 = vector.load %arg4[%c0_6, %c0_7] : memref<1x128xf32, #tpu.memory_space<vmem>>, vector<1x128xf32>
    %11 = vector.broadcast %10 : vector<1x128xf32> to vector<64x128xf32>
    %12 = arith.mulf %9, %11 : vector<64x128xf32>
    %cst_8 = arith.constant dense<0.000000e+00> : vector<64xf32>
    %13 = vector.multi_reduction <add>, %12, %cst_8 [1] : vector<64x128xf32> to vector<64xf32>
    %14 = vector.shape_cast %13 : vector<64xf32> to vector<64x1xf32>
    %15 = vector.shape_cast %14 : vector<64x1xf32> to vector<8x8x1xf32>
    %c0_9 = arith.constant 0 : index
    %c0_10 = arith.constant 0 : index
    %c0_11 = arith.constant 0 : index
    %16 = vector.load %arg5[%c0_9, %c0_10, %c0_11] : memref<8x8x1xf32, #tpu.memory_space<vmem>>, vector<8x8x1xf32>
    %cst_12 = arith.constant 0.000000e+00 : f32
    %17 = vector.broadcast %cst_12 : f32 to vector<8x8x1xf32>
    %18 = arith.cmpf oeq, %16, %17 : vector<8x8x1xf32>
    %cst_13 = arith.constant -1.000000e+09 : f32
    %19 = vector.broadcast %cst_13 : f32 to vector<8x8x1xf32>
    %20 = arith.select %18, %19, %15 : vector<8x8x1xi1>, vector<8x8x1xf32>
    %cst_14 = arith.constant dense<0xFF800000> : vector<8x1xf32>
    %21 = vector.multi_reduction <maximumf>, %20, %cst_14 [1] : vector<8x8x1xf32> to vector<8x1xf32>
    %22 = vector.shape_cast %21 : vector<8x1xf32> to vector<8x1x1xf32>
    %23 = vector.broadcast %22 : vector<8x1x1xf32> to vector<8x8x1xf32>
    %24 = arith.subf %20, %23 : vector<8x8x1xf32>
    %25 = math.exp %24 : vector<8x8x1xf32>
    %cst_15 = arith.constant dense<0.000000e+00> : vector<8x1xf32>
    %26 = vector.multi_reduction <add>, %25, %cst_15 [1] : vector<8x8x1xf32> to vector<8x1xf32>
    %27 = vector.shape_cast %26 : vector<8x1xf32> to vector<8x1x1xf32>
    %28 = tpu.reciprocal %27 {approx = true} : vector<8x1x1xf32> -> vector<8x1x1xf32>
    %29 = vector.broadcast %28 : vector<8x1x1xf32> to vector<8x8x1xf32>
    %30 = arith.mulf %25, %29 : vector<8x8x1xf32>
    %31 = vector.broadcast %30 : vector<8x8x1xf32> to vector<8x8x128xf32>
    %32 = arith.mulf %31, %1 : vector<8x8x128xf32>
    %cst_16 = arith.constant dense<0.000000e+00> : vector<8x128xf32>
    %33 = vector.multi_reduction <add>, %32, %cst_16 [1] : vector<8x8x128xf32> to vector<8x128xf32>
    %c0_17 = arith.constant 0 : index
    %c0_18 = arith.constant 0 : index
    %34 = vector.load %arg6[%c0_17, %c0_18] : memref<8x128xf32, #tpu.memory_space<vmem>>, vector<8x128xf32>
    tpu.vector_store %arg6[%c0_17, %c0_18], %33 {strides = array<i32>} : memref<8x128xf32, #tpu.memory_space<vmem>>, vector<8x128xf32>,
    return
  }
  func.func @transform_0(%arg0: i32) -> (i32, i32, i32) {
    %c0_i32 = arith.constant 0 : i32
    %c0_i32_0 = arith.constant 0 : i32
    %c0_i32_1 = arith.constant 0 : i32
    return %arg0, %c0_i32, %c0_i32_0 : i32, i32, i32
  }
  func.func @transform_1(%arg0: i32) -> (i32, i32) {
    %c0_i32 = arith.constant 0 : i32
    %c0_i32_0 = arith.constant 0 : i32
    %c0_i32_1 = arith.constant 0 : i32
    return %c0_i32, %c0_i32_0 : i32, i32
  }
  func.func @transform_2(%arg0: i32) -> (i32, i32) {
    %c0_i32 = arith.constant 0 : i32
    %c0_i32_0 = arith.constant 0 : i32
    %c0_i32_1 = arith.constant 0 : i32
    return %c0_i32, %c0_i32_0 : i32, i32
  }
  func.func @transform_3(%arg0: i32) -> (i32, i32) {
    %c0_i32 = arith.constant 0 : i32
    %c0_i32_0 = arith.constant 0 : i32
    %c0_i32_1 = arith.constant 0 : i32
    return %c0_i32, %c0_i32_0 : i32, i32
  }
  func.func @transform_4(%arg0: i32) -> (i32, i32, i32) {
    %c0_i32 = arith.constant 0 : i32
    %c0_i32_0 = arith.constant 0 : i32
    %c0_i32_1 = arith.constant 0 : i32
    return %arg0, %c0_i32, %c0_i32_0 : i32, i32, i32
  }
  func.func @transform_5(%arg0: i32) -> (i32, i32) {
    %c0_i32 = arith.constant 0 : i32
    %c0_i32_0 = arith.constant 0 : i32
    return %arg0, %c0_i32 : i32, i32
  }
}

</mosaic_0001>

<llo_original>
// kernel: tpu_custom_call.1
$region0: #{tpu_custom_call.1}
  #allocation0 [shape = 'u32[]', space=smem, size = 0x4, offset = 0x4, fixed_abs, tag = 'smem constant byte address 0x4 - core index']
  #allocation1 [shape = 'u32[144,128]{1,0:T(1,128)}', space=vmem, size = 0x12000, scoped, tag = 'internal scratch']
  %s0 = inlined_call_operand.hbm [shape: bf16[8,8,128], index: 0, kind: input, shape index: {}]
  %s1 = inlined_call_operand.vmem [shape: bf16[128,128], index: 1, kind: input, shape index: {}]
  %s2 = inlined_call_operand.vmem [shape: f32[1,128], index: 2, kind: input, shape index: {}]
  %s3 = inlined_call_operand.vmem [shape: f32[1,128], index: 3, kind: input, shape index: {}]
  %s4 = inlined_call_operand.vmem [shape: f32[8,8,1], index: 4, kind: input, shape index: {}]
  %s5 = inlined_call_operand.hbm [shape: f32[8,128], index: 5, kind: output, shape index: {}]
  %s6 = sld [smem:[#allocation0]]
  $region34: #{tpu_custom_call.1} parent=0
    _
  %s8 = ssub.s32 1, %s6
  %s9 = scalar_select 0, %s8, %s6
  $region1: #{tpu_custom_call.1} parent=0
    #allocation2 [shape = 'u8[16384]{0}', space=vmem, size = 0x4000, scoped, tag = 'input window, operand 0, single buffered']
    #allocation3 [shape = 's32[1]{0}', space=sflag, size = 0x4, scoped, tag = 'scoped memory for tpu_custom_call.1']
    #allocation4 [shape = 's32[1]{0}', space=sflag, size = 0x4, scoped, tag = 'scoped memory for tpu_custom_call.1']
    #allocation5 [shape = 'u8[4096]{0}', space=vmem, size = 0x1000, scoped, tag = 'output window, operand 0, single buffered']
    %10 = vsyncpa [#allocation3], 0
    %11 = vsyncpa [#allocation4], 0
    // Predicated region
    $region2: #{tpu_custom_call.1} parent=1 // pred_check
      _
    $region3: #{tpu_custom_call.1} parent=1 // pred_check_branch
      %13 = sbr.rel (0) target = $region5
    $region4: #{tpu_custom_call.1} parent=1 // pred_region
      %s15 = ssub.s32 512, 512
      %16 = vsyncadd [#allocation3], %s15
      %s17 = sshll.u32 [#allocation2], 4
      %s18 = int_to_ptr.vmem [resolvable:$true] %s17
      %23 = dma.hbm_to_vmem [thread:$0]  %s0, 512, %s18, [#allocation3], 64, 64, 4
    $region5: #{tpu_custom_call.1} parent=1 // pred_fallthru
      _
    // Predicated region
    $region6: #{tpu_custom_call.1} parent=1 // pred_check
      _
    $region7: #{tpu_custom_call.1} parent=1 // pred_check_branch
      %25 = sbr.rel (0) target = $region9
    $region8: #{tpu_custom_call.1} parent=1 // pred_region
      _
    $region9: #{tpu_custom_call.1} parent=1 // pred_fallthru
      _
    // Predicated region
    $region10: #{tpu_custom_call.1} parent=1 // pred_check
      _
    $region11: #{tpu_custom_call.1} parent=1 // pred_check_branch
      %27 = sbr.rel (0) target = $region13
    $region12: #{tpu_custom_call.1} parent=1 // pred_region
      _
    $region13: #{tpu_custom_call.1} parent=1 // pred_fallthru
      _
    // Predicated region
    $region14: #{tpu_custom_call.1} parent=1 // pred_check
      _
    $region15: #{tpu_custom_call.1} parent=1 // pred_check_branch
      %29 = sbr.rel (0) target = $region17
    $region16: #{tpu_custom_call.1} parent=1 // pred_region
      _
    $region17: #{tpu_custom_call.1} parent=1 // pred_fallthru
      _
    // Predicated region
    $region18: #{tpu_custom_call.1} parent=1 // pred_check
      _
    $region19: #{tpu_custom_call.1} parent=1 // pred_check_branch
      %31 = sbr.rel (0) target = $region21
    $region20: #{tpu_custom_call.1} parent=1 // pred_region
      _
    $region21: #{tpu_custom_call.1} parent=1 // pred_fallthru
      _
    // Predicated region
    $region22: #{tpu_custom_call.1} parent=1 // pred_check
      _
    $region23: #{tpu_custom_call.1} parent=1 // pred_check_branch
      %33 = sbr.rel (0) target = $region25
    $region24: #{tpu_custom_call.1} parent=1 // pred_region
      %34 = dma.done [#allocation3], 512
    $region25: #{tpu_custom_call.1} parent=1 // pred_fallthru
      _
    %v36 = vld [vmem:[#allocation2] sm:$0xf]
    %v37 = vld [vmem:[#allocation2 + $0x4] sm:$0xf]
    %v38 = vld [vmem:[#allocation2 + $0x8] sm:$0xf]
    %v39 = vld [vmem:[#allocation2 + $0xc] sm:$0xf]
    %v40 = vld [vmem:[#allocation2 + $0x10] sm:$0xf]
    %v41 = vld [vmem:[#allocation2 + $0x14] sm:$0xf]
    %v42 = vld [vmem:[#allocation2 + $0x18] sm:$0xf]
    %v43 = vld [vmem:[#allocation2 + $0x1c] sm:$0xf]
    %v44 = vunpack.c.l.bf16 %v36
    %v45 = vunpack.c.l.bf16 %v37
    %v46 = vunpack.c.l.bf16 %v38
    %v47 = vunpack.c.l.bf16 %v39
    %v48 = vunpack.c.l.bf16 %v40
    %v49 = vunpack.c.l.bf16 %v41
    %v50 = vunpack.c.l.bf16 %v42
    %v51 = vunpack.c.l.bf16 %v43
    %v52 = vpack.c.bf16 %v45, %v44
    %v53 = vpack.c.bf16 %v47, %v46
    %v54 = vpack.c.bf16 %v49, %v48
    %v55 = vpack.c.bf16 %v51, %v50
    %v56 = vld [vmem:[%s1] sm:$0xf]
    %v57 = vld [vmem:[%s1 + $0x4] sm:$0xf]
    %v58 = vld [vmem:[%s1 + $0x8] sm:$0xf]
    %v59 = vld [vmem:[%s1 + $0xc] sm:$0xf]
    %v60 = vld [vmem:[%s1 + $0x10] sm:$0xf]
    %v61 = vld [vmem:[%s1 + $0x14] sm:$0xf]
    %v62 = vld [vmem:[%s1 + $0x18] sm:$0xf]
    %v63 = vld [vmem:[%s1 + $0x1c] sm:$0xf]
    %v64 = vld [vmem:[%s1 + $0x20] sm:$0xf]
    %v65 = vld [vmem:[%s1 + $0x24] sm:$0xf]
    %v66 = vld [vmem:[%s1 + $0x28] sm:$0xf]
    %v67 = vld [vmem:[%s1 + $0x2c] sm:$0xf]
    %v68 = vld [vmem:[%s1 + $0x30] sm:$0xf]
    %v69 = vld [vmem:[%s1 + $0x34] sm:$0xf]
    %v70 = vld [vmem:[%s1 + $0x38] sm:$0xf]
    %v71 = vld [vmem:[%s1 + $0x3c] sm:$0xf]
    %v72 = vld [vmem:[%s2] sm:$0x1]
    %v74 = vlaneseq
    %v75 = vshrl.u32 %v74, 7
    %v76 = vsub.s32 0, %v75
    %v77 = vrot.slane %v72, %v76
    %v95 = vunpack.c.l.b16 %v56
    %v96 = vunpack.c.l.b16 %v57
    %v97 = vunpack.c.l.b16 %v58
    %v98 = vunpack.c.l.b16 %v59
    %v99 = vunpack.c.l.b16 %v60
    %v100 = vunpack.c.l.b16 %v61
    %v101 = vunpack.c.l.b16 %v62
    %v102 = vunpack.c.l.b16 %v63
    %v103 = vunpack.c.l.b16 %v64
    %v104 = vunpack.c.l.b16 %v65
    %v105 = vunpack.c.l.b16 %v66
    %v106 = vunpack.c.l.b16 %v67
    %v107 = vunpack.c.l.b16 %v68
    %v108 = vunpack.c.l.b16 %v69
    %v109 = vunpack.c.l.b16 %v70
    %v110 = vunpack.c.l.b16 %v71
    %v111 = vpack.c.b16 %v96, %v95
    %v112 = vpack.c.b16 %v98, %v97
    %v113 = vpack.c.b16 %v100, %v99
    %v114 = vpack.c.b16 %v102, %v101
    %v115 = vpack.c.b16 %v104, %v103
    %v116 = vpack.c.b16 %v106, %v105
    %v117 = vpack.c.b16 %v108, %v107
    %v118 = vpack.c.b16 %v110, %v109
    %127 = vmatprep.subr.bf16.mxu0 0
    %128 = vmatpush1.bf16.msra.mxu0 %v111
    %129 = vmatprep.subr.bf16.mxu0 0
    %130 = vmatpush1.bf16.msra.mxu0 %v112
    %131 = vmatprep.subr.bf16.mxu0 0
    %132 = vmatpush1.bf16.msra.mxu0 %v113
    %133 = vmatprep.subr.bf16.mxu0 0
    %134 = vmatpush1.bf16.msra.mxu0 %v114
    %135 = vmatprep.subr.bf16.mxu0 0
    %136 = vmatpush1.bf16.msra.mxu0 %v115
    %137 = vmatprep.subr.bf16.mxu0 0
    %138 = vmatpush1.bf16.msra.mxu0 %v116
    %139 = vmatprep.subr.bf16.mxu0 0
    %140 = vmatpush1.bf16.msra.mxu0 %v117
    %141 = vmatprep.subr.bf16.mxu0 0
    %142 = vmatpush1.bf16.msra.mxu0 %v118
    %143 = vmatprep.subr.bf16.mxu0 0
    %144 = vmatpush1.bf16.msra.mxu0 0
    %145 = vmatprep.subr.bf16.mxu0 0
    %146 = vmatpush1.bf16.msra.mxu0 0
    %147 = vmatprep.subr.bf16.mxu0 0
    %148 = vmatpush1.bf16.msra.mxu0 0
    %149 = vmatprep.subr.bf16.mxu0 0
    %150 = vmatpush1.bf16.msra.mxu0 0
    %151 = vmatprep.subr.bf16.mxu0 0
    %152 = vmatpush1.bf16.msra.mxu0 0
    %153 = vmatprep.subr.bf16.mxu0 0
    %154 = vmatpush1.bf16.msra.mxu0 0
    %155 = vmatprep.subr.bf16.mxu0 0
    %156 = vmatpush1.bf16.msra.mxu0 0
    %157 = vmatprep.subr.bf16.mxu0 0
    %158 = vmatpush1.bf16.msra.mxu0 0
    %159 = vmatprep.mubr.bf16.mxu0 0
    %160 = vmatmul.mubr.bf16.gmra.mrb[0].mxu0 %v52
    %v161 = vpop.f32.mrb[0].mxu0
    %v162 = vadd.f32 %v77, %v161
    %v163 = vpop.f32.mrb[0].mxu0
    %v164 = vpop.f32.mrb[0].mxu0
    %v165 = vadd.f32 %v77, %v164
    %v166 = vpop.f32.mrb[0].mxu0
    %167 = vmatprep.mubr.bf16.mxu0 0
    %168 = vmatmul.mubr.bf16.gmra.mrb[0].mxu0 %v53
    %v169 = vpop.f32.mrb[0].mxu0
    %v170 = vadd.f32 %v77, %v169
    %v171 = vpop.f32.mrb[0].mxu0
    %v172 = vpop.f32.mrb[0].mxu0
    %v173 = vadd.f32 %v77, %v172
    %v174 = vpop.f32.mrb[0].mxu0
    %175 = vmatprep.mubr.bf16.mxu0 0
    %176 = vmatmul.mubr.bf16.gmra.mrb[0].mxu0 %v54
    %v177 = vpop.f32.mrb[0].mxu0
    %v178 = vadd.f32 %v77, %v177
    %v179 = vpop.f32.mrb[0].mxu0
    %v180 = vpop.f32.mrb[0].mxu0
    %v181 = vadd.f32 %v77, %v180
    %v182 = vpop.f32.mrb[0].mxu0
    %183 = vmatprep.mubr.bf16.mxu0 0
    %184 = vmatmul.mubr.bf16.gmra.mrb[0].mxu0 %v55
    %v185 = vpop.f32.mrb[0].mxu0
    %v186 = vadd.f32 %v77, %v185
    %v187 = vpop.f32.mrb[0].mxu0
    %v188 = vpop.f32.mrb[0].mxu0
    %v189 = vadd.f32 %v77, %v188
    %v190 = vpop.f32.mrb[0].mxu0
    %191 = vdwg.mxu0
    %v192 = vtanh.pop %v162
    %v193 = vtanh.pop %v165
    %v194 = vtanh.pop %v170
    %v195 = vtanh.pop %v173
    %v196 = vtanh.pop %v178
    %v197 = vtanh.pop %v181
    %v198 = vtanh.pop %v186
    %v199 = vtanh.pop %v189
    %v200 = vld [vmem:[%s3] sm:$0x1]
    %v202 = vlaneseq
    %v203 = vshrl.u32 %v202, 7
    %v204 = vsub.s32 0, %v203
    %v205 = vrot.slane %v200, %v204
    %v207 = vmul.f32 %v192, %v205
    %v208 = vmul.f32 %v193, %v205
    %v209 = vmul.f32 %v194, %v205
    %v210 = vmul.f32 %v195, %v205
    %v211 = vmul.f32 %v196, %v205
    %v212 = vmul.f32 %v197, %v205
    %v213 = vmul.f32 %v198, %v205
    %v214 = vmul.f32 %v199, %v205
    %215 = vadd.xlane.f32.xlu0 %v207
    %v216 = vpop.xlane.xlu0 %215
    %217 = vadd.xlane.f32.xlu0 %v208
    %v218 = vpop.xlane.xlu0 %217
    %219 = vadd.xlane.f32.xlu0 %v209
    %v220 = vpop.xlane.xlu0 %219
    %221 = vadd.xlane.f32.xlu0 %v210
    %v222 = vpop.xlane.xlu0 %221
    %223 = vadd.xlane.f32.xlu0 %v211
    %v224 = vpop.xlane.xlu0 %223
    %225 = vadd.xlane.f32.xlu0 %v212
    %v226 = vpop.xlane.xlu0 %225
    %227 = vadd.xlane.f32.xlu0 %v213
    %v228 = vpop.xlane.xlu0 %227
    %229 = vadd.xlane.f32.xlu0 %v214
    %v230 = vpop.xlane.xlu0 %229
    %v231 = vld [vmem:[%s4] sm:$0xff]
    %v232 = vld [vmem:[%s4 + $0x8] sm:$0xff]
    %v233 = vld [vmem:[%s4 + $0x10] sm:$0xff]
    %v234 = vld [vmem:[%s4 + $0x18] sm:$0xff]
    %v235 = vld [vmem:[%s4 + $0x20] sm:$0xff]
    %v236 = vld [vmem:[%s4 + $0x28] sm:$0xff]
    %v237 = vld [vmem:[%s4 + $0x30] sm:$0xff]
    %v238 = vld [vmem:[%s4 + $0x38] sm:$0xff]
    %vm239 = vcmp.eq.f32.partialorder %v231, 0.0
    %vm240 = vcmp.eq.f32.partialorder %v232, 0.0
    %vm241 = vcmp.eq.f32.partialorder %v233, 0.0
    %vm242 = vcmp.eq.f32.partialorder %v234, 0.0
    %vm243 = vcmp.eq.f32.partialorder %v235, 0.0
    %vm244 = vcmp.eq.f32.partialorder %v236, 0.0
    %vm245 = vcmp.eq.f32.partialorder %v237, 0.0
    %vm246 = vcmp.eq.f32.partialorder %v238, 0.0
    %v247 = vsel %vm239, -1e+09, %v216
    %v248 = vsel %vm240, -1e+09, %v218
    %v249 = vsel %vm241, -1e+09, %v220
    %v250 = vsel %vm242, -1e+09, %v222
    %v251 = vsel %vm243, -1e+09, %v224
    %v252 = vsel %vm244, -1e+09, %v226
    %v253 = vsel %vm245, -1e+09, %v228
    %v254 = vsel %vm246, -1e+09, %v230
    %vm255 = vcmask 7168
    %v256 = vsel %vm255, %v247, -inf
    %v257 = vrot.slane %v256, 4
    %v258 = vmax.f32 %v256, %v257
    %v259 = vrot.slane %v258, 2
    %v260 = vmax.f32 %v258, %v259
    %v261 = vrot.slane %v260, 1
    %v262 = vmax.f32 %v260, %v261
    %v263 = vsel %vm255, %v248, -inf
    %v264 = vrot.slane %v263, 4
    %v265 = vmax.f32 %v263, %v264
    %v266 = vrot.slane %v265, 2
    %v267 = vmax.f32 %v265, %v266
    %v268 = vrot.slane %v267, 1
    %v269 = vmax.f32 %v267, %v268
    %v270 = vsel %vm255, %v249, -inf
    %v271 = vrot.slane %v270, 4
    %v272 = vmax.f32 %v270, %v271
    %v273 = vrot.slane %v272, 2
    %v274 = vmax.f32 %v272, %v273
    %v275 = vrot.slane %v274, 1
    %v276 = vmax.f32 %v274, %v275
    %v277 = vsel %vm255, %v250, -inf
    %v278 = vrot.slane %v277, 4
    %v279 = vmax.f32 %v277, %v278
    %v280 = vrot.slane %v279, 2
    %v281 = vmax.f32 %v279, %v280
    %v282 = vrot.slane %v281, 1
    %v283 = vmax.f32 %v281, %v282
    %v284 = vsel %vm255, %v251, -inf
    %v285 = vrot.slane %v284, 4
    %v286 = vmax.f32 %v284, %v285
    %v287 = vrot.slane %v286, 2
    %v288 = vmax.f32 %v286, %v287
    %v289 = vrot.slane %v288, 1
    %v290 = vmax.f32 %v288, %v289
    %v291 = vsel %vm255, %v252, -inf
    %v292 = vrot.slane %v291, 4
    %v293 = vmax.f32 %v291, %v292
    %v294 = vrot.slane %v293, 2
    %v295 = vmax.f32 %v293, %v294
    %v296 = vrot.slane %v295, 1
    %v297 = vmax.f32 %v295, %v296
    %v298 = vsel %vm255, %v253, -inf
    %v299 = vrot.slane %v298, 4
    %v300 = vmax.f32 %v298, %v299
    %v301 = vrot.slane %v300, 2
    %v302 = vmax.f32 %v300, %v301
    %v303 = vrot.slane %v302, 1
    %v304 = vmax.f32 %v302, %v303
    %v305 = vsel %vm255, %v254, -inf
    %v306 = vrot.slane %v305, 4
    %v307 = vmax.f32 %v305, %v306
    %v308 = vrot.slane %v307, 2
    %v309 = vmax.f32 %v307, %v308
    %v310 = vrot.slane %v309, 1
    %v311 = vmax.f32 %v309, %v310
    %v312 = vsub.f32 %v247, %v262
    %v313 = vsub.f32 %v248, %v269
    %v314 = vsub.f32 %v249, %v276
    %v315 = vsub.f32 %v250, %v283
    %v316 = vsub.f32 %v251, %v290
    %v317 = vsub.f32 %v252, %v297
    %v318 = vsub.f32 %v253, %v304
    %v319 = vsub.f32 %v254, %v311
    %v320 = vmul.f32 %v312, 1.442695
    %v321 = vpow.pop %v320
    %v322 = vmul.f32 %v313, 1.442695
    %v323 = vpow.pop %v322
    %v324 = vmul.f32 %v314, 1.442695
    %v325 = vpow.pop %v324
    %v326 = vmul.f32 %v315, 1.442695
    %v327 = vpow.pop %v326
    %v328 = vmul.f32 %v316, 1.442695
    %v329 = vpow.pop %v328
    %v330 = vmul.f32 %v317, 1.442695
    %v331 = vpow.pop %v330
    %v332 = vmul.f32 %v318, 1.442695
    %v333 = vpow.pop %v332
    %v334 = vmul.f32 %v319, 1.442695
    %v335 = vpow.pop %v334
    %v336 = vsel %vm255, %v321, 0.0
    %v337 = vrot.slane %v336, 4
    %v338 = vadd.f32 %v336, %v337
    %v339 = vrot.slane %v338, 2
    %v340 = vadd.f32 %v338, %v339
    %v341 = vrot.slane %v340, 1
    %v342 = vadd.f32 %v340, %v341
    %v343 = vsel %vm255, %v323, 0.0
    %v344 = vrot.slane %v343, 4
    %v345 = vadd.f32 %v343, %v344
    %v346 = vrot.slane %v345, 2
    %v347 = vadd.f32 %v345, %v346
    %v348 = vrot.slane %v347, 1
    %v349 = vadd.f32 %v347, %v348
    %v350 = vsel %vm255, %v325, 0.0
    %v351 = vrot.slane %v350, 4
    %v352 = vadd.f32 %v350, %v351
    %v353 = vrot.slane %v352, 2
    %v354 = vadd.f32 %v352, %v353
    %v355 = vrot.slane %v354, 1
    %v356 = vadd.f32 %v354, %v355
    %v357 = vsel %vm255, %v327, 0.0
    %v358 = vrot.slane %v357, 4
    %v359 = vadd.f32 %v357, %v358
    %v360 = vrot.slane %v359, 2
    %v361 = vadd.f32 %v359, %v360
    %v362 = vrot.slane %v361, 1
    %v363 = vadd.f32 %v361, %v362
    %v364 = vsel %vm255, %v329, 0.0
    %v365 = vrot.slane %v364, 4
    %v366 = vadd.f32 %v364, %v365
    %v367 = vrot.slane %v366, 2
    %v368 = vadd.f32 %v366, %v367
    %v369 = vrot.slane %v368, 1
    %v370 = vadd.f32 %v368, %v369
    %v371 = vsel %vm255, %v331, 0.0
    %v372 = vrot.slane %v371, 4
    %v373 = vadd.f32 %v371, %v372
    %v374 = vrot.slane %v373, 2
    %v375 = vadd.f32 %v373, %v374
    %v376 = vrot.slane %v375, 1
    %v377 = vadd.f32 %v375, %v376
    %v378 = vsel %vm255, %v333, 0.0
    %v379 = vrot.slane %v378, 4
    %v380 = vadd.f32 %v378, %v379
    %v381 = vrot.slane %v380, 2
    %v382 = vadd.f32 %v380, %v381
    %v383 = vrot.slane %v382, 1
    %v384 = vadd.f32 %v382, %v383
    %v385 = vsel %vm255, %v335, 0.0
    %v386 = vrot.slane %v385, 4
    %v387 = vadd.f32 %v385, %v386
    %v388 = vrot.slane %v387, 2
    %v389 = vadd.f32 %v387, %v388
    %v390 = vrot.slane %v389, 1
    %v391 = vadd.f32 %v389, %v390
    %v392 = vrcp.pop %v342
    %v393 = vrcp.pop %v349
    %v394 = vrcp.pop %v356
    %v395 = vrcp.pop %v363
    %v396 = vrcp.pop %v370
    %v397 = vrcp.pop %v377
    %v398 = vrcp.pop %v384
    %v399 = vrcp.pop %v391
    %v400 = vmul.f32 %v321, %v392
    %v401 = vmul.f32 %v323, %v393
    %v402 = vmul.f32 %v325, %v394
    %v403 = vmul.f32 %v327, %v395
    %v404 = vmul.f32 %v329, %v396
    %v405 = vmul.f32 %v331, %v397
    %v406 = vmul.f32 %v333, %v398
    %v407 = vmul.f32 %v335, %v399
    %409 = vset.pattern.permute.xlu0 0
    %410 = vperm.xlu0 %409, %v400
    %v411 = vpop.permute.xlu0 %410
    %414 = vset.pattern.permute.xlu0 0
    %415 = vperm.xlu0 %414, %v401
    %v416 = vpop.permute.xlu0 %415
    %419 = vset.pattern.permute.xlu0 0
    %420 = vperm.xlu0 %419, %v402
    %v421 = vpop.permute.xlu0 %420
    %424 = vset.pattern.permute.xlu0 0
    %425 = vperm.xlu0 %424, %v403
    %v426 = vpop.permute.xlu0 %425
    %429 = vset.pattern.permute.xlu0 0
    %430 = vperm.xlu0 %429, %v404
    %v431 = vpop.permute.xlu0 %430
    %434 = vset.pattern.permute.xlu0 0
    %435 = vperm.xlu0 %434, %v405
    %v436 = vpop.permute.xlu0 %435
    %439 = vset.pattern.permute.xlu0 0
    %440 = vperm.xlu0 %439, %v406
    %v441 = vpop.permute.xlu0 %440
    %444 = vset.pattern.permute.xlu0 0
    %445 = vperm.xlu0 %444, %v407
    %v446 = vpop.permute.xlu0 %445
    %v448 = vmul.f32 %v411, %v44
    %v449 = vmul.f32 %v416, %v45
    %v450 = vmul.f32 %v421, %v46
    %v451 = vmul.f32 %v426, %v47
    %v452 = vmul.f32 %v431, %v48
    %v453 = vmul.f32 %v436, %v49
    %v454 = vmul.f32 %v441, %v50
    %v455 = vmul.f32 %v446, %v51
    %v456 = vrot.slane %v448, 4
    %v457 = vadd.f32 %v448, %v456
    %v458 = vrot.slane %v457, 2
    %v459 = vadd.f32 %v457, %v458
    %v460 = vrot.slane %v459, 1
    %v461 = vadd.f32 %v459, %v460
    %v462 = vrot.slane %v449, 4
    %v463 = vadd.f32 %v449, %v462
    %v464 = vrot.slane %v463, 2
    %v465 = vadd.f32 %v463, %v464
    %v466 = vrot.slane %v465, 1
    %v467 = vadd.f32 %v465, %v466
    %v468 = vrot.slane %v450, 4
    %v469 = vadd.f32 %v450, %v468
    %v470 = vrot.slane %v469, 2
    %v471 = vadd.f32 %v469, %v470
    %v472 = vrot.slane %v471, 1
    %v473 = vadd.f32 %v471, %v472
    %v474 = vrot.slane %v451, 4
    %v475 = vadd.f32 %v451, %v474
    %v476 = vrot.slane %v475, 2
    %v477 = vadd.f32 %v475, %v476
    %v478 = vrot.slane %v477, 1
    %v479 = vadd.f32 %v477, %v478
    %v480 = vrot.slane %v452, 4
    %v481 = vadd.f32 %v452, %v480
    %v482 = vrot.slane %v481, 2
    %v483 = vadd.f32 %v481, %v482
    %v484 = vrot.slane %v483, 1
    %v485 = vadd.f32 %v483, %v484
    %v486 = vrot.slane %v453, 4
    %v487 = vadd.f32 %v453, %v486
    %v488 = vrot.slane %v487, 2
    %v489 = vadd.f32 %v487, %v488
    %v490 = vrot.slane %v489, 1
    %v491 = vadd.f32 %v489, %v490
    %v492 = vrot.slane %v454, 4
    %v493 = vadd.f32 %v454, %v492
    %v494 = vrot.slane %v493, 2
    %v495 = vadd.f32 %v493, %v494
    %v496 = vrot.slane %v495, 1
    %v497 = vadd.f32 %v495, %v496
    %v498 = vrot.slane %v455, 4
    %v499 = vadd.f32 %v455, %v498
    %v500 = vrot.slane %v499, 2
    %v501 = vadd.f32 %v499, %v500
    %v502 = vrot.slane %v501, 1
    %v503 = vadd.f32 %v501, %v502
    %vm512 = vcmask 1041409
    %v513 = vsel %vm512, %v467, %v461
    %vm514 = vcmask 1042434
    %v515 = vsel %vm514, %v473, %v513
    %vm516 = vcmask 1043459
    %v517 = vsel %vm516, %v479, %v515
    %vm518 = vcmask 1044484
    %v519 = vsel %vm518, %v485, %v517
    %vm520 = vcmask 1045509
    %v521 = vsel %vm520, %v491, %v519
    %vm522 = vcmask 1046534
    %v523 = vsel %vm522, %v497, %v521
    %vm524 = vcmask 1047559
    %v525 = vsel %vm524, %v503, %v523
    %527 = vst [vmem:[#allocation5] sm:$0xff] %v525
    // Predicated region
    $region26: #{tpu_custom_call.1} parent=1 // pred_check
      _
    $region27: #{tpu_custom_call.1} parent=1 // pred_check_branch
      %529 = sbr.rel (0) target = $region29
    $region28: #{tpu_custom_call.1} parent=1 // pred_region
      %s531 = ssub.s32 128, 128
      %532 = vsyncadd [#allocation4], %s531
      %s534 = sshll.u32 [#allocation5], 4
      %s535 = int_to_ptr.vmem [resolvable:$true] %s534
      %537 = dma.vmem_to_hbm [thread:$0]  %s535, 128, %s5, [#allocation4]
    $region29: #{tpu_custom_call.1} parent=1 // pred_fallthru
      _
    // Predicated region
    $region30: #{tpu_custom_call.1} parent=1 // pred_check
      _
    $region31: #{tpu_custom_call.1} parent=1 // pred_check_branch
      %539 = sbr.rel (0) target = $region33
    $region32: #{tpu_custom_call.1} parent=1 // pred_region
      %540 = dma.done [#allocation4], 128
    $region33: #{tpu_custom_call.1} parent=1 // pred_fallthru
      _
    %541 = vsyncpa [#allocation3], 1
    %542 = vsyncpa [#allocation4], 1

</llo_original>
